<compile_context>
chip_gen: v5e
topology: v5e:2x2
jax: 0.10.0
libtpu: 0.0.40
codegen_flags: <defaults>
</compile_context>

<pallas_src>
import jax
import jax.numpy as jnp
from jax.experimental import pallas as pl
from jax.experimental.pallas import tpu as pltpu

_LANES = 128
_DEFAULT_BLOCK_BYTES = 8 << 20   # 8 MiB per input block (review: 4-8 MiB)
_FLOOR_BLOCK_BYTES = 1 << 20     # keep per-step blocks >= ~1 MiB when splitting


def _siqu_kernel(x_ref, o_ref):
    x = x_ref[...]
    half = jnp.asarray(0.5, x.dtype)
    # sigmoid(x) = 0.5 * tanh(0.5 * x) + 0.5 : tanh rides the single EUP slot,
    # the multiplies/adds ride the VPU slot; all in the input dtype so bf16
    # inputs never silently promote to f32 on v6e/v7x.
    sig = half * jnp.tanh(half * x) + half
    o_ref[...] = x * (x * sig)


def _round_up(a: int, b: int) -> int:
    return ((a + b - 1) // b) * b


def _vmem_capacity_bytes() -> int:
    try:
        cap = getattr(pltpu.get_tpu_info(), "vmem_capacity_bytes", None)
        if cap:
            return int(cap)
    except Exception:
        pass
    return 64 << 20  # conservative (v7x-sized) fallback


def _pick_tile_rows(rows: int, min_rows: int, tr_cap: int, floor_rows: int) -> int:
    """Row-tile height: biggest block that still gives both v7x TCs work."""
    if rows <= 2 * min_rows:
        return rows  # tiny tensor: one full-extent block (always legal)
    # Big tensor: the byte-sized cap already yields >= 4 grid steps, so both
    # v7x TensorCores get >= 2 blocks each and per-step overhead stays < ~5%.
    if pl.cdiv(rows, tr_cap) >= 4:
        return tr_cap
    # Mid-size: shrink toward >= 4 steps while each block stays >= ~1 MiB.
    t4 = max(min_rows, (rows // 4) // min_rows * min_rows)
    if t4 >= floor_rows:
        return min(t4, tr_cap)
    # Small-mid: settle for >= 2 steps so a grid of 1 never idles a v7x core.
    t2 = _round_up(pl.cdiv(rows, 2), min_rows)
    return min(t2, tr_cap)


def _siqu_2d(x2d: jax.Array, target_block_bytes, in_place: bool) -> jax.Array:
    rows = x2d.shape[0]
    dtype = x2d.dtype
    itemsize = jnp.dtype(dtype).itemsize
    # Native packed tile height: 8 rows (f32), 16 (bf16/f16), 32 (int8/fp8).
    min_rows = max(8, 32 // itemsize)

    # Generation-aware VMEM budget: footprint = 2 bufs x (in + out) = 4x block,
    # plus Mosaic scratch headroom. ~48 MiB budget on v7x, ~96 MiB on v5e/v6e.
    vmem_budget = min(_vmem_capacity_bytes() * 3 // 4, 96 << 20)
    max_block_bytes = max(_LANES * itemsize * min_rows, vmem_budget // 4)
    block_bytes = min(target_block_bytes or _DEFAULT_BLOCK_BYTES, max_block_bytes)

    tr_cap = max(min_rows,
                 (block_bytes // (_LANES * itemsize)) // min_rows * min_rows)
    floor_rows = max(min_rows,
                     (_FLOOR_BLOCK_BYTES // (_LANES * itemsize)) // min_rows * min_rows)
    tr = _pick_tile_rows(rows, min_rows, tr_cap, floor_rows)
    grid = (pl.cdiv(rows, tr),)

    call_kwargs = {}
    if in_place:
        # Only saves the output allocation if the caller donates x at the jit
        # boundary; otherwise XLA inserts a copy (still correct).
        call_kwargs["input_output_aliases"] = {0: 0}

    n_elems = rows * _LANES
    return pl.pallas_call(
        _siqu_kernel,
        out_shape=jax.ShapeDtypeStruct((rows, _LANES), dtype),
        grid_spec=pltpu.PrefetchScalarGridSpec(
            num_scalar_prefetch=0,
            grid=grid,
            in_specs=[pl.BlockSpec((tr, _LANES), lambda i: (i, 0))],
            out_specs=pl.BlockSpec((tr, _LANES), lambda i: (i, 0)),
        ),
        compiler_params=pltpu.CompilerParams(
            dimension_semantics=("parallel",),
            vmem_limit_bytes=vmem_budget,
        ),
        cost_estimate=pl.CostEstimate(
            flops=5 * n_elems,
            transcendentals=n_elems,
            bytes_accessed=2 * n_elems * itemsize,
        ),
        **call_kwargs,
    )(x2d)


def siqu(x: jax.Array, *, target_block_bytes: int = None,
         in_place: bool = False) -> jax.Array:
    """Applies SiQU elementwise. Any shape/dtype; returns same shape/dtype."""
    orig_shape = x.shape
    n = x.size
    if n == 0:
        return x

    if n % _LANES == 0:
        # Zero-copy path: contiguous reshape to a lane-dense 2D slab.
        out2d = _siqu_2d(x.reshape(n // _LANES, _LANES), target_block_bytes, in_place)
        return out2d.reshape(orig_shape)

    # Rare path (size not a multiple of 128): run the zero-copy lane-dense
    # kernel on the aligned prefix and a tiny (1,128) call on the <128-element
    # tail — no full-size padded temp; only the final concat touches all bytes.
    x_flat = x.reshape(-1)
    n_aligned = n - (n % _LANES)
    parts = []
    if n_aligned > 0:
        prefix = x_flat[:n_aligned].reshape(n_aligned // _LANES, _LANES)
        parts.append(_siqu_2d(prefix, target_block_bytes, False).reshape(-1))
    tail = x_flat[n_aligned:]
    tail_len = n - n_aligned
    tail_padded = jnp.pad(tail, (0, _LANES - tail_len)).reshape(1, _LANES)
    tail_out = _siqu_2d(tail_padded, target_block_bytes, False).reshape(-1)[:tail_len]
    parts.append(tail_out)
    out_flat = jnp.concatenate(parts) if len(parts) > 1 else parts[0]
    return out_flat.reshape(orig_shape)


def _ref_siqu(x):
    return x * (x * jax.nn.sigmoid(x))


if __name__ == "__main__":
    key = jax.random.PRNGKey(0)

    # NCHW-style input consistent with elementwise SiQU usage.
    x = jax.random.normal(key, (2, 4, 16, 16), dtype=jnp.float32)
    y = jax.block_until_ready(siqu(x))
    assert y.shape == x.shape and y.dtype == x.dtype
    assert jnp.allclose(y, _ref_siqu(x), atol=1e-5, rtol=1e-5)

    # Awkward size (not a multiple of 128 elements) exercises the prefix+tail path.
    x2 = jax.random.normal(jax.random.PRNGKey(0), (3, 5, 7, 11), dtype=jnp.float32)
    y2 = jax.block_until_ready(siqu(x2))
    assert y2.shape == x2.shape and y2.dtype == x2.dtype
    assert jnp.allclose(y2, _ref_siqu(x2), atol=1e-5, rtol=1e-5)

    # Larger slab exercises the multi-step grid (>= 2 blocks) path.
    x3 = jax.random.normal(jax.random.PRNGKey(0), (4, 64, 128), dtype=jnp.float32)
    y3 = jax.block_until_ready(siqu(x3))
    assert jnp.allclose(y3, _ref_siqu(x3), atol=1e-5, rtol=1e-5)

    # bf16 path: compute stays in bf16 inside the kernel.
    x4 = jax.random.normal(jax.random.PRNGKey(0), (2, 8, 128), dtype=jnp.bfloat16)
    y4 = jax.block_until_ready(siqu(x4))
    ref4 = _ref_siqu(x4.astype(jnp.float32))
    assert y4.dtype == jnp.bfloat16
    assert jnp.allclose(y4.astype(jnp.float32), ref4, atol=0.05, rtol=0.05)

    print("KERNEL_OK")
</pallas_src>

<mosaic_0001>
module attributes {stable_mosaic.version = 11 : i64} {
  func.func @_siqu_kernel(%arg0: i32, %arg1: memref<16x128xf32, #tpu.memory_space<vmem>>, %arg2: memref<16x128xf32, #tpu.memory_space<vmem>>) attributes {dimension_semantics = [#tpu.dimension_semantics<parallel>], iteration_bounds = array<i64: 1>, scalar_prefetch = 0 : i64, scratch_operands = 0 : i64, tpu.core_type = #tpu.core_type<tc>, window_params = [{transform_indices = @transform_0, window_bounds = array<i64: 16, 128>}, {transform_indices = @transform_1, window_bounds = array<i64: 16, 128>}]} {
    %c0 = arith.constant 0 : index
    %c0_0 = arith.constant 0 : index
    %0 = vector.load %arg1[%c0, %c0_0] : memref<16x128xf32, #tpu.memory_space<vmem>>, vector<16x128xf32>
    %cst = arith.constant 5.000000e-01 : f32
    %1 = vector.broadcast %cst : f32 to vector<16x128xf32>
    %2 = arith.mulf %1, %0 : vector<16x128xf32>
    %3 = math.tanh %2 : vector<16x128xf32>
    %cst_1 = arith.constant 5.000000e-01 : f32
    %4 = vector.broadcast %cst_1 : f32 to vector<16x128xf32>
    %5 = arith.mulf %4, %3 : vector<16x128xf32>
    %cst_2 = arith.constant 5.000000e-01 : f32
    %6 = vector.broadcast %cst_2 : f32 to vector<16x128xf32>
    %7 = arith.addf %5, %6 : vector<16x128xf32>
    %8 = arith.mulf %0, %7 : vector<16x128xf32>
    %9 = arith.mulf %0, %8 : vector<16x128xf32>
    %c0_3 = arith.constant 0 : index
    %c0_4 = arith.constant 0 : index
    %10 = vector.load %arg2[%c0_3, %c0_4] : memref<16x128xf32, #tpu.memory_space<vmem>>, vector<16x128xf32>
    tpu.vector_store %arg2[%c0_3, %c0_4], %9 {strides = array<i32>} : memref<16x128xf32, #tpu.memory_space<vmem>>, vector<16x128xf32>,
    return
  }
  func.func @transform_0(%arg0: i32) -> (i32, i32) {
    %c0_i32 = arith.constant 0 : i32
    %c0_i32_0 = arith.constant 0 : i32
    return %arg0, %c0_i32 : i32, i32
  }
  func.func @transform_1(%arg0: i32) -> (i32, i32) {
    %c0_i32 = arith.constant 0 : i32
    %c0_i32_0 = arith.constant 0 : i32
    return %arg0, %c0_i32 : i32, i32
  }
}

</mosaic_0001>

<llo_original>
// kernel: tpu_custom_call.1
$region0: #{tpu_custom_call.1}
  #allocation0 [shape = 'u32[]', space=smem, size = 0x4, offset = 0x4, fixed_abs, tag = 'smem constant byte address 0x4 - core index']
  #allocation1 [shape = 'u32[72,128]{1,0:T(1,128)}', space=vmem, size = 0x9000, scoped, tag = 'internal scratch']
  %s0 = inlined_call_operand.hbm [shape: f32[16,128], index: 0, kind: input, shape index: {}]
  %s1 = inlined_call_operand.hbm [shape: f32[16,128], index: 1, kind: output, shape index: {}]
  %s2 = sld [smem:[#allocation0]]
  $region18: #{tpu_custom_call.1} parent=0
    _
  %s4 = ssub.s32 1, %s2
  %s5 = scalar_select 0, %s4, %s2
  $region1: #{tpu_custom_call.1} parent=0
    #allocation2 [shape = 'u8[8192]{0}', space=vmem, size = 0x2000, scoped, tag = 'input window, operand 0, single buffered']
    #allocation3 [shape = 's32[1]{0}', space=sflag, size = 0x4, scoped, tag = 'scoped memory for tpu_custom_call.1']
    #allocation4 [shape = 's32[1]{0}', space=sflag, size = 0x4, scoped, tag = 'scoped memory for tpu_custom_call.1']
    #allocation5 [shape = 'u8[8192]{0}', space=vmem, size = 0x2000, scoped, tag = 'output window, operand 0, single buffered']
    %6 = vsyncpa [#allocation3], 0
    %7 = vsyncpa [#allocation4], 0
    // Predicated region
    $region2: #{tpu_custom_call.1} parent=1 // pred_check
      _
    $region3: #{tpu_custom_call.1} parent=1 // pred_check_branch
      %9 = sbr.rel (0) target = $region5
    $region4: #{tpu_custom_call.1} parent=1 // pred_region
      %11 = vsyncadd [#allocation3], 0
      %s12 = sshll.u32 %s0, 4
      %s13 = int_to_ptr.hbm [resolvable:$true] %s12
      %s14 = sshll.u32 [#allocation2], 4
      %s15 = int_to_ptr.vmem [resolvable:$true] %s14
      %20 = dma.hbm_to_vmem [thread:$0]  %s13, 256, %s15, [#allocation3], 128, 128, 8
    $region5: #{tpu_custom_call.1} parent=1 // pred_fallthru
      _
    // Predicated region
    $region6: #{tpu_custom_call.1} parent=1 // pred_check
      _
    $region7: #{tpu_custom_call.1} parent=1 // pred_check_branch
      %22 = sbr.rel (0) target = $region9
    $region8: #{tpu_custom_call.1} parent=1 // pred_region
      %24 = dma.done [#allocation3], 256
    $region9: #{tpu_custom_call.1} parent=1 // pred_fallthru
      _
    %v25 = vld [vmem:[#allocation2] sm:$0xff]
    %v26 = vld [vmem:[#allocation2 + $0x8] sm:$0xff]
    %v27 = vmul.f32 %v25, 0.5
    %v28 = vmul.f32 %v26, 0.5
    %v29 = vtanh.pop %v27
    %v30 = vtanh.pop %v28
    %v31 = vmul.f32 %v29, 0.5
    %v32 = vmul.f32 %v30, 0.5
    %v33 = vadd.f32 %v31, 0.5
    %v34 = vadd.f32 %v32, 0.5
    %v35 = vmul.f32 %v25, %v33
    %v36 = vmul.f32 %v26, %v34
    %v37 = vmul.f32 %v25, %v35
    %v38 = vmul.f32 %v26, %v36
    %39 = vst [vmem:[#allocation5] sm:$0xff] %v37
    %40 = vst [vmem:[#allocation5 + $0x8] sm:$0xff] %v38
    // Predicated region
    $region10: #{tpu_custom_call.1} parent=1 // pred_check
      _
    $region11: #{tpu_custom_call.1} parent=1 // pred_check_branch
      %42 = sbr.rel (0) target = $region13
    $region12: #{tpu_custom_call.1} parent=1 // pred_region
      %44 = vsyncadd [#allocation4], 0
      %s45 = sshll.u32 [#allocation5], 4
      %s46 = int_to_ptr.vmem [resolvable:$true] %s45
      %s47 = sshll.u32 %s1, 4
      %s48 = int_to_ptr.hbm [resolvable:$true] %s47
      %53 = dma.vmem_to_hbm [thread:$0]  %s46, 256, %s48, [#allocation4], 128, 128, 8
    $region13: #{tpu_custom_call.1} parent=1 // pred_fallthru
      _
    // Predicated region
    $region14: #{tpu_custom_call.1} parent=1 // pred_check
      _
    $region15: #{tpu_custom_call.1} parent=1 // pred_check_branch
      %55 = sbr.rel (0) target = $region17
    $region16: #{tpu_custom_call.1} parent=1 // pred_region
      %57 = dma.done [#allocation4], 256
    $region17: #{tpu_custom_call.1} parent=1 // pred_fallthru
      _
    %58 = vsyncpa [#allocation3], 1
    %59 = vsyncpa [#allocation4], 1

</llo_original>
